<compile_context>
chip_gen: v7x
topology: tpu7x:2x2x1
jax: 0.10.0
libtpu: 0.0.40
codegen_flags: <defaults>
</compile_context>

<pallas_src>
import functools

import jax
import jax.numpy as jnp
from jax.experimental import pallas as pl
from jax.experimental.pallas import tpu as pltpu


def _round_up(x: int, m: int) -> int:
    return ((x + m - 1) // m) * m


def _fused_mlp_kernel(*refs, n_layers: int, n_valid: int, eps: float):
    """Whole MLP in one kernel body: [BN -> Linear -> ReLU] x L, last ReLU removed.

    refs = (x_ref, [gamma, beta, w, bias] * n_layers, o_ref), all padded 2-D VMEM tiles.
    """
    x_ref = refs[0]
    o_ref = refs[-1]
    param_refs = refs[1:-1]

    x = x_ref[...].astype(jnp.float32)                     # (Np, C0p)
    n_pad = x.shape[0]

    # Row mask: padded batch rows must not contribute to BN batch statistics.
    row_ids = jax.lax.broadcasted_iota(jnp.int32, (n_pad, 1), 0)
    row_mask = row_ids < n_valid                           # (Np, 1)
    inv_n = jnp.float32(1.0 / float(n_valid))

    for i in range(n_layers):
        gamma = param_refs[4 * i][...]                     # (1, Cin_p)
        beta = param_refs[4 * i + 1][...]                  # (1, Cin_p)
        w = param_refs[4 * i + 2][...]                     # (Cin_p, Cout_p)
        b = param_refs[4 * i + 3][...]                     # (1, Cout_p)

        # --- BatchNorm1d, training-mode batch stats (biased variance), f32, masked ---
        xm = jnp.where(row_mask, x, 0.0)
        mean = jnp.sum(xm, axis=0, keepdims=True) * inv_n
        centered = x - mean
        cm = jnp.where(row_mask, centered, 0.0)
        var = jnp.sum(cm * cm, axis=0, keepdims=True) * inv_n
        y = centered * jax.lax.rsqrt(var + eps) * gamma + beta
        # Zero padded rows so they cannot leak into later layers through the matmul.
        y = jnp.where(row_mask, y, 0.0)

        # --- Linear: bf16 operands, f32 accumulation (full-rate MXU path) ---
        out = jnp.dot(y.astype(jnp.bfloat16), w.astype(jnp.bfloat16),
                      preferred_element_type=jnp.float32)
        out = out + b

        # --- ReLU on all but the last layer (mirrors `del layers[-1:]`) ---
        if i < n_layers - 1:
            out = jnp.maximum(out, 0.0)
        x = out

    o_ref[...] = x.astype(o_ref.dtype)


def mlp_forward(x, params, eps=1e-5):
    """Fused forward pass. x: (N, C_in) f32; params: list of (gamma, beta, W, b)."""
    n, c0 = x.shape
    n_layers = len(params)

    # Lane/sublane-aligned padded shapes.
    n_pad = _round_up(max(n, 8), 8)
    dims = [c0] + [w.shape[1] for (_, _, w, _) in params]
    dims_pad = [_round_up(max(d, 128), 128) for d in dims]

    # Zero-pad the input (padded rows/cols are masked / neutral inside the kernel).
    x_p = jnp.zeros((n_pad, dims_pad[0]), jnp.float32).at[:n, :c0].set(x)

    flat_inputs = [x_p]
    in_specs = [pl.BlockSpec((n_pad, dims_pad[0]), lambda i: (0, 0))]

    flops = 0
    transcendentals = 0
    bytes_accessed = x_p.size * 4 + n_pad * dims_pad[-1] * 4

    for li, (gamma, beta, w, b) in enumerate(params):
        ci, co = w.shape
        cip, cop = dims_pad[li], dims_pad[li + 1]
        g_p = jnp.zeros((1, cip), jnp.float32).at[:, :ci].set(gamma.reshape(1, ci))
        be_p = jnp.zeros((1, cip), jnp.float32).at[:, :ci].set(beta.reshape(1, ci))
        w_p = jnp.zeros((cip, cop), jnp.float32).at[:ci, :co].set(w)
        b_p = jnp.zeros((1, cop), jnp.float32).at[:, :co].set(b.reshape(1, co))
        for arr in (g_p, be_p, w_p, b_p):
            flat_inputs.append(arr)
            in_specs.append(pl.BlockSpec(arr.shape, lambda i: (0, 0)))
        flops += 2 * n_pad * cip * cop + 8 * n_pad * cip
        transcendentals += cip
        bytes_accessed += (2 * cip + cip * cop + cop) * 4

    kernel = functools.partial(_fused_mlp_kernel,
                               n_layers=n_layers, n_valid=n, eps=eps)

    out_p = pl.pallas_call(
        kernel,
        out_shape=jax.ShapeDtypeStruct((n_pad, dims_pad[-1]), jnp.float32),
        grid=(1,),
        in_specs=in_specs,
        out_specs=pl.BlockSpec((n_pad, dims_pad[-1]), lambda i: (0, 0)),
        compiler_params=pltpu.CompilerParams(
            dimension_semantics=("arbitrary",)),
        cost_estimate=pl.CostEstimate(flops=flops,
                                      transcendentals=transcendentals,
                                      bytes_accessed=bytes_accessed),
    )(*flat_inputs)

    # Strip padding back off.
    return out_p[:n, :dims[-1]]


def init_mlp_params(key, input_nfeatures, hidden_layers, num_classes):
    """Deterministic parameter init matching the module's shapes (PyTorch-like init)."""
    channels = [input_nfeatures] + list(hidden_layers) + [num_classes]
    params = []
    for c, c_next in zip(channels[:-1], channels[1:]):
        key, kw, kb = jax.random.split(key, 3)
        gamma = jnp.ones((1, c), jnp.float32)                 # BN weight
        beta = jnp.zeros((1, c), jnp.float32)                 # BN bias
        bound = 1.0 / (c ** 0.5)
        w = jax.random.uniform(kw, (c, c_next), jnp.float32, -bound, bound)
        b = jax.random.uniform(kb, (1, c_next), jnp.float32, -bound, bound)
        params.append((gamma, beta, w, b))
    return params


def mlp_reference(x, params, eps=1e-5, matmul_dtype=jnp.float32):
    """Pure-JAX reference of the same forward (train-mode BN)."""
    n_layers = len(params)
    for i, (gamma, beta, w, b) in enumerate(params):
        mean = jnp.mean(x, axis=0, keepdims=True)
        var = jnp.mean((x - mean) ** 2, axis=0, keepdims=True)
        x = (x - mean) * jax.lax.rsqrt(var + eps) * gamma + beta
        x = jnp.dot(x.astype(matmul_dtype), w.astype(matmul_dtype),
                    preferred_element_type=jnp.float32) + b
        if i < n_layers - 1:
            x = jnp.maximum(x, 0.0)
    return x


if __name__ == "__main__":
    # Small shapes consistent with the module: 2-D input (batch, features).
    batch = 8
    input_nfeatures = 16
    hidden_layers = (32, 16)
    num_classes = 4

    key = jax.random.PRNGKey(0)
    key, kx = jax.random.split(key)
    x = jax.random.normal(kx, (batch, input_nfeatures), jnp.float32)

    params = init_mlp_params(key, input_nfeatures, hidden_layers, num_classes)

    out = mlp_forward(x, params)
    out = jax.block_until_ready(out)
    assert out.shape == (batch, num_classes)

    # (a) Implementation check vs. a reference that uses the same bf16 matmul path.
    ref_bf16 = mlp_reference(x, params, matmul_dtype=jnp.bfloat16)
    assert jnp.allclose(out, ref_bf16, atol=1e-3, rtol=1e-3)

    # (b) Semantics check vs. the exact f32 module math (bf16 operands => relaxed tol).
    ref_f32 = mlp_reference(x, params, matmul_dtype=jnp.float32)
    assert jnp.allclose(out, ref_f32, atol=5e-2, rtol=5e-2)

    print("KERNEL_OK")
</pallas_src>

<mosaic_0001>
module attributes {stable_mosaic.version = 11 : i64} {
  func.func @_fused_mlp_kernel(%arg0: i32, %arg1: memref<8x128xf32, #tpu.memory_space<vmem>>, %arg2: memref<1x128xf32, #tpu.memory_space<vmem>>, %arg3: memref<1x128xf32, #tpu.memory_space<vmem>>, %arg4: memref<128x128xf32, #tpu.memory_space<vmem>>, %arg5: memref<1x128xf32, #tpu.memory_space<vmem>>, %arg6: memref<1x128xf32, #tpu.memory_space<vmem>>, %arg7: memref<1x128xf32, #tpu.memory_space<vmem>>, %arg8: memref<128x128xf32, #tpu.memory_space<vmem>>, %arg9: memref<1x128xf32, #tpu.memory_space<vmem>>, %arg10: memref<1x128xf32, #tpu.memory_space<vmem>>, %arg11: memref<1x128xf32, #tpu.memory_space<vmem>>, %arg12: memref<128x128xf32, #tpu.memory_space<vmem>>, %arg13: memref<1x128xf32, #tpu.memory_space<vmem>>, %arg14: memref<8x128xf32, #tpu.memory_space<vmem>>) attributes {dimension_semantics = [#tpu.dimension_semantics<arbitrary>], iteration_bounds = array<i64: 1>, scalar_prefetch = 0 : i64, scratch_operands = 0 : i64, tpu.core_type = #tpu.core_type<tc>, window_params = [{pipeline_mode = #tpu.pipeline_mode<synchronous>, transform_indices = @transform_0, window_bounds = array<i64: 8, 128>}, {pipeline_mode = #tpu.pipeline_mode<synchronous>, transform_indices = @transform_1, window_bounds = array<i64: 1, 128>}, {pipeline_mode = #tpu.pipeline_mode<synchronous>, transform_indices = @transform_2, window_bounds = array<i64: 1, 128>}, {pipeline_mode = #tpu.pipeline_mode<synchronous>, transform_indices = @transform_3, window_bounds = array<i64: 128, 128>}, {pipeline_mode = #tpu.pipeline_mode<synchronous>, transform_indices = @transform_4, window_bounds = array<i64: 1, 128>}, {pipeline_mode = #tpu.pipeline_mode<synchronous>, transform_indices = @transform_5, window_bounds = array<i64: 1, 128>}, {pipeline_mode = #tpu.pipeline_mode<synchronous>, transform_indices = @transform_6, window_bounds = array<i64: 1, 128>}, {pipeline_mode = #tpu.pipeline_mode<synchronous>, transform_indices = @transform_7, window_bounds = array<i64: 128, 128>}, {pipeline_mode = #tpu.pipeline_mode<synchronous>, transform_indices = @transform_8, window_bounds = array<i64: 1, 128>}, {pipeline_mode = #tpu.pipeline_mode<synchronous>, transform_indices = @transform_9, window_bounds = array<i64: 1, 128>}, {pipeline_mode = #tpu.pipeline_mode<synchronous>, transform_indices = @transform_10, window_bounds = array<i64: 1, 128>}, {pipeline_mode = #tpu.pipeline_mode<synchronous>, transform_indices = @transform_11, window_bounds = array<i64: 128, 128>}, {pipeline_mode = #tpu.pipeline_mode<synchronous>, transform_indices = @transform_12, window_bounds = array<i64: 1, 128>}, {pipeline_mode = #tpu.pipeline_mode<synchronous>, transform_indices = @transform_13, window_bounds = array<i64: 8, 128>}]} {
    %c0 = arith.constant 0 : index
    %c0_0 = arith.constant 0 : index
    %0 = vector.load %arg1[%c0, %c0_0] : memref<8x128xf32, #tpu.memory_space<vmem>>, vector<8x128xf32>
    %1 = tpu.iota {dimensions = array<i32: 0>} : vector<8x1xi32>
    %c8_i32 = arith.constant 8 : i32
    %2 = vector.broadcast %c8_i32 : i32 to vector<8x1xi32>
    %3 = arith.cmpi slt, %1, %2 : vector<8x1xi32>
    %c0_1 = arith.constant 0 : index
    %c0_2 = arith.constant 0 : index
    %4 = vector.load %arg2[%c0_1, %c0_2] : memref<1x128xf32, #tpu.memory_space<vmem>>, vector<1x128xf32>
    %c0_3 = arith.constant 0 : index
    %c0_4 = arith.constant 0 : index
    %5 = vector.load %arg3[%c0_3, %c0_4] : memref<1x128xf32, #tpu.memory_space<vmem>>, vector<1x128xf32>
    %c0_5 = arith.constant 0 : index
    %c0_6 = arith.constant 0 : index
    %6 = vector.load %arg4[%c0_5, %c0_6] : memref<128x128xf32, #tpu.memory_space<vmem>>, vector<128x128xf32>
    %c0_7 = arith.constant 0 : index
    %c0_8 = arith.constant 0 : index
    %7 = vector.load %arg5[%c0_7, %c0_8] : memref<1x128xf32, #tpu.memory_space<vmem>>, vector<1x128xf32>
    %cst = arith.constant 0.000000e+00 : f32
    %8 = vector.shape_cast %3 : vector<8x1xi1> to vector<8x1xi1>
    %9 = vector.broadcast %8 : vector<8x1xi1> to vector<8x128xi1>
    %10 = vector.broadcast %cst : f32 to vector<8x128xf32>
    %11 = arith.select %9, %0, %10 : vector<8x128xi1>, vector<8x128xf32>
    %cst_9 = arith.constant dense<0.000000e+00> : vector<128xf32>
    %12 = vector.multi_reduction <add>, %11, %cst_9 [0] : vector<8x128xf32> to vector<128xf32>
    %13 = vector.shape_cast %12 : vector<128xf32> to vector<1x128xf32>
    %cst_10 = arith.constant 1.250000e-01 : f32
    %14 = vector.broadcast %cst_10 : f32 to vector<1x128xf32>
    %15 = arith.mulf %13, %14 : vector<1x128xf32>
    %16 = vector.broadcast %15 : vector<1x128xf32> to vector<8x128xf32>
    %17 = arith.subf %0, %16 : vector<8x128xf32>
    %cst_11 = arith.constant 0.000000e+00 : f32
    %18 = vector.shape_cast %3 : vector<8x1xi1> to vector<8x1xi1>
    %19 = vector.broadcast %18 : vector<8x1xi1> to vector<8x128xi1>
    %20 = vector.broadcast %cst_11 : f32 to vector<8x128xf32>
    %21 = arith.select %19, %17, %20 : vector<8x128xi1>, vector<8x128xf32>
    %22 = arith.mulf %21, %21 : vector<8x128xf32>
    %cst_12 = arith.constant dense<0.000000e+00> : vector<128xf32>
    %23 = vector.multi_reduction <add>, %22, %cst_12 [0] : vector<8x128xf32> to vector<128xf32>
    %24 = vector.shape_cast %23 : vector<128xf32> to vector<1x128xf32>
    %cst_13 = arith.constant 1.250000e-01 : f32
    %25 = vector.broadcast %cst_13 : f32 to vector<1x128xf32>
    %26 = arith.mulf %24, %25 : vector<1x128xf32>
    %cst_14 = arith.constant 9.99999974E-6 : f32
    %27 = vector.broadcast %cst_14 : f32 to vector<1x128xf32>
    %28 = arith.addf %26, %27 : vector<1x128xf32>
    %29 = math.rsqrt %28 : vector<1x128xf32>
    %30 = vector.broadcast %29 : vector<1x128xf32> to vector<8x128xf32>
    %31 = arith.mulf %17, %30 : vector<8x128xf32>
    %32 = vector.broadcast %4 : vector<1x128xf32> to vector<8x128xf32>
    %33 = arith.mulf %31, %32 : vector<8x128xf32>
    %34 = vector.broadcast %5 : vector<1x128xf32> to vector<8x128xf32>
    %35 = arith.addf %33, %34 : vector<8x128xf32>
    %cst_15 = arith.constant 0.000000e+00 : f32
    %36 = vector.shape_cast %3 : vector<8x1xi1> to vector<8x1xi1>
    %37 = vector.broadcast %36 : vector<8x1xi1> to vector<8x128xi1>
    %38 = vector.broadcast %cst_15 : f32 to vector<8x128xf32>
    %39 = arith.select %37, %35, %38 : vector<8x128xi1>, vector<8x128xf32>
    %40 = arith.truncf %39 : vector<8x128xf32> to vector<8x128xbf16>
    %41 = arith.truncf %6 : vector<128x128xf32> to vector<128x128xbf16>
    %cst_16 = arith.constant dense<0.000000e+00> : vector<8x128xf32>
    %42 = tpu.matmul %40, %41, %cst_16 {dimension_numbers = #tpu.dot_dimension_numbers<[1], [0], [0], [1], [0, 0, 1, 1], [], []>} : vector<8x128xbf16>, vector<128x128xbf16>, vector<8x128xf32> -> vector<8x128xf32>
    %43 = vector.broadcast %7 : vector<1x128xf32> to vector<8x128xf32>
    %44 = arith.addf %42, %43 : vector<8x128xf32>
    %cst_17 = arith.constant 0.000000e+00 : f32
    %45 = vector.broadcast %cst_17 : f32 to vector<8x128xf32>
    %46 = arith.maximumf %44, %45 : vector<8x128xf32>
    %c0_18 = arith.constant 0 : index
    %c0_19 = arith.constant 0 : index
    %47 = vector.load %arg6[%c0_18, %c0_19] : memref<1x128xf32, #tpu.memory_space<vmem>>, vector<1x128xf32>
    %c0_20 = arith.constant 0 : index
    %c0_21 = arith.constant 0 : index
    %48 = vector.load %arg7[%c0_20, %c0_21] : memref<1x128xf32, #tpu.memory_space<vmem>>, vector<1x128xf32>
    %c0_22 = arith.constant 0 : index
    %c0_23 = arith.constant 0 : index
    %49 = vector.load %arg8[%c0_22, %c0_23] : memref<128x128xf32, #tpu.memory_space<vmem>>, vector<128x128xf32>
    %c0_24 = arith.constant 0 : index
    %c0_25 = arith.constant 0 : index
    %50 = vector.load %arg9[%c0_24, %c0_25] : memref<1x128xf32, #tpu.memory_space<vmem>>, vector<1x128xf32>
    %cst_26 = arith.constant 0.000000e+00 : f32
    %51 = vector.shape_cast %3 : vector<8x1xi1> to vector<8x1xi1>
    %52 = vector.broadcast %51 : vector<8x1xi1> to vector<8x128xi1>
    %53 = vector.broadcast %cst_26 : f32 to vector<8x128xf32>
    %54 = arith.select %52, %46, %53 : vector<8x128xi1>, vector<8x128xf32>
    %cst_27 = arith.constant dense<0.000000e+00> : vector<128xf32>
    %55 = vector.multi_reduction <add>, %54, %cst_27 [0] : vector<8x128xf32> to vector<128xf32>
    %56 = vector.shape_cast %55 : vector<128xf32> to vector<1x128xf32>
    %cst_28 = arith.constant 1.250000e-01 : f32
    %57 = vector.broadcast %cst_28 : f32 to vector<1x128xf32>
    %58 = arith.mulf %56, %57 : vector<1x128xf32>
    %59 = vector.broadcast %58 : vector<1x128xf32> to vector<8x128xf32>
    %60 = arith.subf %46, %59 : vector<8x128xf32>
    %cst_29 = arith.constant 0.000000e+00 : f32
    %61 = vector.shape_cast %3 : vector<8x1xi1> to vector<8x1xi1>
    %62 = vector.broadcast %61 : vector<8x1xi1> to vector<8x128xi1>
    %63 = vector.broadcast %cst_29 : f32 to vector<8x128xf32>
    %64 = arith.select %62, %60, %63 : vector<8x128xi1>, vector<8x128xf32>
    %65 = arith.mulf %64, %64 : vector<8x128xf32>
    %cst_30 = arith.constant dense<0.000000e+00> : vector<128xf32>
    %66 = vector.multi_reduction <add>, %65, %cst_30 [0] : vector<8x128xf32> to vector<128xf32>
    %67 = vector.shape_cast %66 : vector<128xf32> to vector<1x128xf32>
    %cst_31 = arith.constant 1.250000e-01 : f32
    %68 = vector.broadcast %cst_31 : f32 to vector<1x128xf32>
    %69 = arith.mulf %67, %68 : vector<1x128xf32>
    %cst_32 = arith.constant 9.99999974E-6 : f32
    %70 = vector.broadcast %cst_32 : f32 to vector<1x128xf32>
    %71 = arith.addf %69, %70 : vector<1x128xf32>
    %72 = math.rsqrt %71 : vector<1x128xf32>
    %73 = vector.broadcast %72 : vector<1x128xf32> to vector<8x128xf32>
    %74 = arith.mulf %60, %73 : vector<8x128xf32>
    %75 = vector.broadcast %47 : vector<1x128xf32> to vector<8x128xf32>
    %76 = arith.mulf %74, %75 : vector<8x128xf32>
    %77 = vector.broadcast %48 : vector<1x128xf32> to vector<8x128xf32>
    %78 = arith.addf %76, %77 : vector<8x128xf32>
    %cst_33 = arith.constant 0.000000e+00 : f32
    %79 = vector.shape_cast %3 : vector<8x1xi1> to vector<8x1xi1>
    %80 = vector.broadcast %79 : vector<8x1xi1> to vector<8x128xi1>
    %81 = vector.broadcast %cst_33 : f32 to vector<8x128xf32>
    %82 = arith.select %80, %78, %81 : vector<8x128xi1>, vector<8x128xf32>
    %83 = arith.truncf %82 : vector<8x128xf32> to vector<8x128xbf16>
    %84 = arith.truncf %49 : vector<128x128xf32> to vector<128x128xbf16>
    %cst_34 = arith.constant dense<0.000000e+00> : vector<8x128xf32>
    %85 = tpu.matmul %83, %84, %cst_34 {dimension_numbers = #tpu.dot_dimension_numbers<[1], [0], [0], [1], [0, 0, 1, 1], [], []>} : vector<8x128xbf16>, vector<128x128xbf16>, vector<8x128xf32> -> vector<8x128xf32>
    %86 = vector.broadcast %50 : vector<1x128xf32> to vector<8x128xf32>
    %87 = arith.addf %85, %86 : vector<8x128xf32>
    %cst_35 = arith.constant 0.000000e+00 : f32
    %88 = vector.broadcast %cst_35 : f32 to vector<8x128xf32>
    %89 = arith.maximumf %87, %88 : vector<8x128xf32>
    %c0_36 = arith.constant 0 : index
    %c0_37 = arith.constant 0 : index
    %90 = vector.load %arg10[%c0_36, %c0_37] : memref<1x128xf32, #tpu.memory_space<vmem>>, vector<1x128xf32>
    %c0_38 = arith.constant 0 : index
    %c0_39 = arith.constant 0 : index
    %91 = vector.load %arg11[%c0_38, %c0_39] : memref<1x128xf32, #tpu.memory_space<vmem>>, vector<1x128xf32>
    %c0_40 = arith.constant 0 : index
    %c0_41 = arith.constant 0 : index
    %92 = vector.load %arg12[%c0_40, %c0_41] : memref<128x128xf32, #tpu.memory_space<vmem>>, vector<128x128xf32>
    %c0_42 = arith.constant 0 : index
    %c0_43 = arith.constant 0 : index
    %93 = vector.load %arg13[%c0_42, %c0_43] : memref<1x128xf32, #tpu.memory_space<vmem>>, vector<1x128xf32>
    %cst_44 = arith.constant 0.000000e+00 : f32
    %94 = vector.shape_cast %3 : vector<8x1xi1> to vector<8x1xi1>
    %95 = vector.broadcast %94 : vector<8x1xi1> to vector<8x128xi1>
    %96 = vector.broadcast %cst_44 : f32 to vector<8x128xf32>
    %97 = arith.select %95, %89, %96 : vector<8x128xi1>, vector<8x128xf32>
    %cst_45 = arith.constant dense<0.000000e+00> : vector<128xf32>
    %98 = vector.multi_reduction <add>, %97, %cst_45 [0] : vector<8x128xf32> to vector<128xf32>
    %99 = vector.shape_cast %98 : vector<128xf32> to vector<1x128xf32>
    %cst_46 = arith.constant 1.250000e-01 : f32
    %100 = vector.broadcast %cst_46 : f32 to vector<1x128xf32>
    %101 = arith.mulf %99, %100 : vector<1x128xf32>
    %102 = vector.broadcast %101 : vector<1x128xf32> to vector<8x128xf32>
    %103 = arith.subf %89, %102 : vector<8x128xf32>
    %cst_47 = arith.constant 0.000000e+00 : f32
    %104 = vector.shape_cast %3 : vector<8x1xi1> to vector<8x1xi1>
    %105 = vector.broadcast %104 : vector<8x1xi1> to vector<8x128xi1>
    %106 = vector.broadcast %cst_47 : f32 to vector<8x128xf32>
    %107 = arith.select %105, %103, %106 : vector<8x128xi1>, vector<8x128xf32>
    %108 = arith.mulf %107, %107 : vector<8x128xf32>
    %cst_48 = arith.constant dense<0.000000e+00> : vector<128xf32>
    %109 = vector.multi_reduction <add>, %108, %cst_48 [0] : vector<8x128xf32> to vector<128xf32>
    %110 = vector.shape_cast %109 : vector<128xf32> to vector<1x128xf32>
    %cst_49 = arith.constant 1.250000e-01 : f32
    %111 = vector.broadcast %cst_49 : f32 to vector<1x128xf32>
    %112 = arith.mulf %110, %111 : vector<1x128xf32>
    %cst_50 = arith.constant 9.99999974E-6 : f32
    %113 = vector.broadcast %cst_50 : f32 to vector<1x128xf32>
    %114 = arith.addf %112, %113 : vector<1x128xf32>
    %115 = math.rsqrt %114 : vector<1x128xf32>
    %116 = vector.broadcast %115 : vector<1x128xf32> to vector<8x128xf32>
    %117 = arith.mulf %103, %116 : vector<8x128xf32>
    %118 = vector.broadcast %90 : vector<1x128xf32> to vector<8x128xf32>
    %119 = arith.mulf %117, %118 : vector<8x128xf32>
    %120 = vector.broadcast %91 : vector<1x128xf32> to vector<8x128xf32>
    %121 = arith.addf %119, %120 : vector<8x128xf32>
    %cst_51 = arith.constant 0.000000e+00 : f32
    %122 = vector.shape_cast %3 : vector<8x1xi1> to vector<8x1xi1>
    %123 = vector.broadcast %122 : vector<8x1xi1> to vector<8x128xi1>
    %124 = vector.broadcast %cst_51 : f32 to vector<8x128xf32>
    %125 = arith.select %123, %121, %124 : vector<8x128xi1>, vector<8x128xf32>
    %126 = arith.truncf %125 : vector<8x128xf32> to vector<8x128xbf16>
    %127 = arith.truncf %92 : vector<128x128xf32> to vector<128x128xbf16>
    %cst_52 = arith.constant dense<0.000000e+00> : vector<8x128xf32>
    %128 = tpu.matmul %126, %127, %cst_52 {dimension_numbers = #tpu.dot_dimension_numbers<[1], [0], [0], [1], [0, 0, 1, 1], [], []>} : vector<8x128xbf16>, vector<128x128xbf16>, vector<8x128xf32> -> vector<8x128xf32>
    %129 = vector.broadcast %93 : vector<1x128xf32> to vector<8x128xf32>
    %130 = arith.addf %128, %129 : vector<8x128xf32>
    %c0_53 = arith.constant 0 : index
    %c0_54 = arith.constant 0 : index
    %131 = vector.load %arg14[%c0_53, %c0_54] : memref<8x128xf32, #tpu.memory_space<vmem>>, vector<8x128xf32>
    tpu.vector_store %arg14[%c0_53, %c0_54], %130 {strides = array<i32>} : memref<8x128xf32, #tpu.memory_space<vmem>>, vector<8x128xf32>,
    return
  }
  func.func @transform_0(%arg0: i32) -> (i32, i32) {
    %c0_i32 = arith.constant 0 : i32
    %c0_i32_0 = arith.constant 0 : i32
    %c0_i32_1 = arith.constant 0 : i32
    return %c0_i32, %c0_i32_0 : i32, i32
  }
  func.func @transform_1(%arg0: i32) -> (i32, i32) {
    %c0_i32 = arith.constant 0 : i32
    %c0_i32_0 = arith.constant 0 : i32
    %c0_i32_1 = arith.constant 0 : i32
    return %c0_i32, %c0_i32_0 : i32, i32
  }
  func.func @transform_2(%arg0: i32) -> (i32, i32) {
    %c0_i32 = arith.constant 0 : i32
    %c0_i32_0 = arith.constant 0 : i32
    %c0_i32_1 = arith.constant 0 : i32
    return %c0_i32, %c0_i32_0 : i32, i32
  }
  func.func @transform_3(%arg0: i32) -> (i32, i32) {
    %c0_i32 = arith.constant 0 : i32
    %c0_i32_0 = arith.constant 0 : i32
    %c0_i32_1 = arith.constant 0 : i32
    return %c0_i32, %c0_i32_0 : i32, i32
  }
  func.func @transform_4(%arg0: i32) -> (i32, i32) {
    %c0_i32 = arith.constant 0 : i32
    %c0_i32_0 = arith.constant 0 : i32
    %c0_i32_1 = arith.constant 0 : i32
    return %c0_i32, %c0_i32_0 : i32, i32
  }
  func.func @transform_5(%arg0: i32) -> (i32, i32) {
    %c0_i32 = arith.constant 0 : i32
    %c0_i32_0 = arith.constant 0 : i32
    %c0_i32_1 = arith.constant 0 : i32
    return %c0_i32, %c0_i32_0 : i32, i32
  }
  func.func @transform_6(%arg0: i32) -> (i32, i32) {
    %c0_i32 = arith.constant 0 : i32
    %c0_i32_0 = arith.constant 0 : i32
    %c0_i32_1 = arith.constant 0 : i32
    return %c0_i32, %c0_i32_0 : i32, i32
  }
  func.func @transform_7(%arg0: i32) -> (i32, i32) {
    %c0_i32 = arith.constant 0 : i32
    %c0_i32_0 = arith.constant 0 : i32
    %c0_i32_1 = arith.constant 0 : i32
    return %c0_i32, %c0_i32_0 : i32, i32
  }
  func.func @transform_8(%arg0: i32) -> (i32, i32) {
    %c0_i32 = arith.constant 0 : i32
    %c0_i32_0 = arith.constant 0 : i32
    %c0_i32_1 = arith.constant 0 : i32
    return %c0_i32, %c0_i32_0 : i32, i32
  }
  func.func @transform_9(%arg0: i32) -> (i32, i32) {
    %c0_i32 = arith.constant 0 : i32
    %c0_i32_0 = arith.constant 0 : i32
    %c0_i32_1 = arith.constant 0 : i32
    return %c0_i32, %c0_i32_0 : i32, i32
  }
  func.func @transform_10(%arg0: i32) -> (i32, i32) {
    %c0_i32 = arith.constant 0 : i32
    %c0_i32_0 = arith.constant 0 : i32
    %c0_i32_1 = arith.constant 0 : i32
    return %c0_i32, %c0_i32_0 : i32, i32
  }
  func.func @transform_11(%arg0: i32) -> (i32, i32) {
    %c0_i32 = arith.constant 0 : i32
    %c0_i32_0 = arith.constant 0 : i32
    %c0_i32_1 = arith.constant 0 : i32
    return %c0_i32, %c0_i32_0 : i32, i32
  }
  func.func @transform_12(%arg0: i32) -> (i32, i32) {
    %c0_i32 = arith.constant 0 : i32
    %c0_i32_0 = arith.constant 0 : i32
    %c0_i32_1 = arith.constant 0 : i32
    return %c0_i32, %c0_i32_0 : i32, i32
  }
  func.func @transform_13(%arg0: i32) -> (i32, i32) {
    %c0_i32 = arith.constant 0 : i32
    %c0_i32_0 = arith.constant 0 : i32
    %c0_i32_1 = arith.constant 0 : i32
    return %c0_i32, %c0_i32_0 : i32, i32
  }
}

</mosaic_0001>

<llo_original>
// kernel: tpu_custom_call.1
$region0: #{tpu_custom_call.1}
  #allocation0 [shape = 'u32[]', space=smem, size = 0x4, offset = 0x4, fixed_abs, tag = 'smem constant byte address 0x4 - core index']
  #allocation1 [shape = 'u32[144,128]{1,0:T(1,128)}', space=vmem, size = 0x12000, scoped, tag = 'internal scratch']
  %s0 = inlined_call_operand.hbm [shape: f32[8,128], index: 0, kind: input, shape index: {}]
  %s1 = inlined_call_operand.vmem [shape: f32[1,128], index: 1, kind: input, shape index: {}]
  %s2 = inlined_call_operand.vmem [shape: f32[1,128], index: 2, kind: input, shape index: {}]
  %s3 = inlined_call_operand.hbm [shape: f32[128,128], index: 3, kind: input, shape index: {}]
  %s4 = inlined_call_operand.vmem [shape: f32[1,128], index: 4, kind: input, shape index: {}]
  %s5 = inlined_call_operand.vmem [shape: f32[1,128], index: 5, kind: input, shape index: {}]
  %s6 = inlined_call_operand.vmem [shape: f32[1,128], index: 6, kind: input, shape index: {}]
  %s7 = inlined_call_operand.hbm [shape: f32[128,128], index: 7, kind: input, shape index: {}]
  %s8 = inlined_call_operand.vmem [shape: f32[1,128], index: 8, kind: input, shape index: {}]
  %s9 = inlined_call_operand.vmem [shape: f32[1,128], index: 9, kind: input, shape index: {}]
  %s10 = inlined_call_operand.vmem [shape: f32[1,128], index: 10, kind: input, shape index: {}]
  %s11 = inlined_call_operand.hbm [shape: f32[128,128], index: 11, kind: input, shape index: {}]
  %s12 = inlined_call_operand.vmem [shape: f32[1,128], index: 12, kind: input, shape index: {}]
  %s13 = inlined_call_operand.hbm [shape: f32[8,128], index: 13, kind: output, shape index: {}]
  %s14 = sld [smem:[#allocation0]]
  $region78: #{tpu_custom_call.1} parent=0
    _
  %s16 = ssub.s32 1, %s14
  %s17 = scalar_select 0, %s16, %s14
  $region1: #{tpu_custom_call.1} parent=0
    #allocation2 [shape = 'u8[4096]{0}', space=vmem, size = 0x1000, scoped, tag = 'input window, operand 0, single buffered']
    #allocation3 [shape = 's32[1]{0}', space=sflag, size = 0x4, scoped, tag = 'scoped memory for tpu_custom_call.1']
    #allocation4 [shape = 's32[1]{0}', space=sflag, size = 0x4, scoped, tag = 'scoped memory for tpu_custom_call.1']
    #allocation5 [shape = 'u8[65536]{0}', space=vmem, size = 0x10000, scoped, tag = 'input window, operand 3, single buffered']
    #allocation6 [shape = 's32[1]{0}', space=sflag, size = 0x4, scoped, tag = 'scoped memory for tpu_custom_call.1']
    #allocation7 [shape = 'u8[65536]{0}', space=vmem, size = 0x10000, scoped, tag = 'input window, operand 7, single buffered']
    #allocation8 [shape = 'u8[65536]{0}', space=vmem, size = 0x10000, scoped, tag = 'input window, operand 11, single buffered']
    #allocation9 [shape = 's32[1]{0}', space=sflag, size = 0x4, scoped, tag = 'scoped memory for tpu_custom_call.1']
    #allocation10 [shape = 'u8[4096]{0}', space=vmem, size = 0x1000, scoped, tag = 'output window, operand 0, single buffered']
    %18 = vsyncpa [#allocation3], 0
    %19 = vsyncpa [#allocation6], 0
    %20 = vsyncpa [#allocation9], 0
    %21 = vsyncpa [#allocation4], 0
    // Predicated region
    $region2: #{tpu_custom_call.1} parent=1 // pred_check
      _
    $region3: #{tpu_custom_call.1} parent=1 // pred_check_branch
      %23 = sbr.rel (0) target = $region5
    $region4: #{tpu_custom_call.1} parent=1 // pred_region
      %s25 = ssub.s32 128, 128
      %26 = vsyncadd [#allocation3], %s25
      %s28 = sshll.u32 [#allocation2], 4
      %s29 = int_to_ptr.vmem [resolvable:$true] %s28
      %31 = dma.hbm_to_vmem [thread:$0]  %s0, 128, %s29, [#allocation3]
    $region5: #{tpu_custom_call.1} parent=1 // pred_fallthru
      _
    // Predicated region
    $region6: #{tpu_custom_call.1} parent=1 // pred_check
      _
    $region7: #{tpu_custom_call.1} parent=1 // pred_check_branch
      %33 = sbr.rel (0) target = $region9
    $region8: #{tpu_custom_call.1} parent=1 // pred_region
      _
    $region9: #{tpu_custom_call.1} parent=1 // pred_fallthru
      _
    // Predicated region
    $region10: #{tpu_custom_call.1} parent=1 // pred_check
      _
    $region11: #{tpu_custom_call.1} parent=1 // pred_check_branch
      %35 = sbr.rel (0) target = $region13
    $region12: #{tpu_custom_call.1} parent=1 // pred_region
      _
    $region13: #{tpu_custom_call.1} parent=1 // pred_fallthru
      _
    // Predicated region
    $region14: #{tpu_custom_call.1} parent=1 // pred_check
      _
    $region15: #{tpu_custom_call.1} parent=1 // pred_check_branch
      %37 = sbr.rel (0) target = $region17
    $region16: #{tpu_custom_call.1} parent=1 // pred_region
      %s39 = ssub.s32 2048, 2048
      %40 = vsyncadd [#allocation6], %s39
      %s41 = sshll.u32 [#allocation5], 4
      %s42 = int_to_ptr.vmem [resolvable:$true] %s41
      %47 = dma.hbm_to_vmem [thread:$0]  %s3, 2048, %s42, [#allocation6], 128, 128, 8
    $region17: #{tpu_custom_call.1} parent=1 // pred_fallthru
      _
    // Predicated region
    $region18: #{tpu_custom_call.1} parent=1 // pred_check
      _
    $region19: #{tpu_custom_call.1} parent=1 // pred_check_branch
      %49 = sbr.rel (0) target = $region21
    $region20: #{tpu_custom_call.1} parent=1 // pred_region
      _
    $region21: #{tpu_custom_call.1} parent=1 // pred_fallthru
      _
    // Predicated region
    $region22: #{tpu_custom_call.1} parent=1 // pred_check
      _
    $region23: #{tpu_custom_call.1} parent=1 // pred_check_branch
      %51 = sbr.rel (0) target = $region25
    $region24: #{tpu_custom_call.1} parent=1 // pred_region
      _
    $region25: #{tpu_custom_call.1} parent=1 // pred_fallthru
      _
    // Predicated region
    $region26: #{tpu_custom_call.1} parent=1 // pred_check
      _
    $region27: #{tpu_custom_call.1} parent=1 // pred_check_branch
      %53 = sbr.rel (0) target = $region29
    $region28: #{tpu_custom_call.1} parent=1 // pred_region
      _
    $region29: #{tpu_custom_call.1} parent=1 // pred_fallthru
      _
    // Predicated region
    $region30: #{tpu_custom_call.1} parent=1 // pred_check
      _
    $region31: #{tpu_custom_call.1} parent=1 // pred_check_branch
      %55 = sbr.rel (0) target = $region33
    $region32: #{tpu_custom_call.1} parent=1 // pred_region
      %s57 = ssub.s32 2048, 2048
      %58 = vsyncadd [#allocation6], %s57
      %s59 = sshll.u32 [#allocation7], 4
      %s60 = int_to_ptr.vmem [resolvable:$true] %s59
      %65 = dma.hbm_to_vmem [thread:$0]  %s7, 2048, %s60, [#allocation6], 128, 128, 8
    $region33: #{tpu_custom_call.1} parent=1 // pred_fallthru
      _
    // Predicated region
    $region34: #{tpu_custom_call.1} parent=1 // pred_check
      _
    $region35: #{tpu_custom_call.1} parent=1 // pred_check_branch
      %67 = sbr.rel (0) target = $region37
    $region36: #{tpu_custom_call.1} parent=1 // pred_region
      _
    $region37: #{tpu_custom_call.1} parent=1 // pred_fallthru
      _
    // Predicated region
    $region38: #{tpu_custom_call.1} parent=1 // pred_check
      _
    $region39: #{tpu_custom_call.1} parent=1 // pred_check_branch
      %69 = sbr.rel (0) target = $region41
    $region40: #{tpu_custom_call.1} parent=1 // pred_region
      _
    $region41: #{tpu_custom_call.1} parent=1 // pred_fallthru
      _
    // Predicated region
    $region42: #{tpu_custom_call.1} parent=1 // pred_check
      _
    $region43: #{tpu_custom_call.1} parent=1 // pred_check_branch
      %71 = sbr.rel (0) target = $region45
    $region44: #{tpu_custom_call.1} parent=1 // pred_region
      _
    $region45: #{tpu_custom_call.1} parent=1 // pred_fallthru
      _
    // Predicated region
    $region46: #{tpu_custom_call.1} parent=1 // pred_check
      _
    $region47: #{tpu_custom_call.1} parent=1 // pred_check_branch
      %73 = sbr.rel (0) target = $region49
    $region48: #{tpu_custom_call.1} parent=1 // pred_region
      %s75 = ssub.s32 2048, 2048
      %76 = vsyncadd [#allocation9], %s75
      %s77 = sshll.u32 [#allocation8], 4
      %s78 = int_to_ptr.vmem [resolvable:$true] %s77
      %83 = dma.hbm_to_vmem [thread:$0]  %s11, 2048, %s78, [#allocation9], 128, 128, 8
    $region49: #{tpu_custom_call.1} parent=1 // pred_fallthru
      _
    // Predicated region
    $region50: #{tpu_custom_call.1} parent=1 // pred_check
      _
    $region51: #{tpu_custom_call.1} parent=1 // pred_check_branch
      %85 = sbr.rel (0) target = $region53
    $region52: #{tpu_custom_call.1} parent=1 // pred_region
      _
    $region53: #{tpu_custom_call.1} parent=1 // pred_fallthru
      _
    // Predicated region
    $region54: #{tpu_custom_call.1} parent=1 // pred_check
      _
    $region55: #{tpu_custom_call.1} parent=1 // pred_check_branch
      %87 = sbr.rel (0) target = $region57
    $region56: #{tpu_custom_call.1} parent=1 // pred_region
      %88 = dma.done [#allocation3], 128
    $region57: #{tpu_custom_call.1} parent=1 // pred_fallthru
      _
    // Predicated region
    $region58: #{tpu_custom_call.1} parent=1 // pred_check
      _
    $region59: #{tpu_custom_call.1} parent=1 // pred_check_branch
      %90 = sbr.rel (0) target = $region61
    $region60: #{tpu_custom_call.1} parent=1 // pred_region
      %91 = dma.done [#allocation6], 2048
    $region61: #{tpu_custom_call.1} parent=1 // pred_fallthru
      _
    // Predicated region
    $region62: #{tpu_custom_call.1} parent=1 // pred_check
      _
    $region63: #{tpu_custom_call.1} parent=1 // pred_check_branch
      %93 = sbr.rel (0) target = $region65
    $region64: #{tpu_custom_call.1} parent=1 // pred_region
      %94 = dma.done [#allocation6], 2048
    $region65: #{tpu_custom_call.1} parent=1 // pred_fallthru
      _
    // Predicated region
    $region66: #{tpu_custom_call.1} parent=1 // pred_check
      _
    $region67: #{tpu_custom_call.1} parent=1 // pred_check_branch
      %96 = sbr.rel (0) target = $region69
    $region68: #{tpu_custom_call.1} parent=1 // pred_region
      %97 = dma.done [#allocation9], 2048
    $region69: #{tpu_custom_call.1} parent=1 // pred_fallthru
      _
    %v99 = vld [vmem:[#allocation2] sm:$0xff]
    %v100 = vlaneseq
    %v101 = vshrl.u32 %v100, 7
    %vm102 = vcmp.lt.s32.totalorder %v101, 8
    %v103 = vld [vmem:[%s1] sm:$0x1]
    %v104 = vld [vmem:[%s2] sm:$0x1]
    %v105 = vld [vmem:[#allocation5] sm:$0xff]
    %v106 = vld [vmem:[#allocation5 + $0x8] sm:$0xff]
    %v107 = vld [vmem:[#allocation5 + $0x10] sm:$0xff]
    %v108 = vld [vmem:[#allocation5 + $0x18] sm:$0xff]
    %v109 = vld [vmem:[#allocation5 + $0x20] sm:$0xff]
    %v110 = vld [vmem:[#allocation5 + $0x28] sm:$0xff]
    %v111 = vld [vmem:[#allocation5 + $0x30] sm:$0xff]
    %v112 = vld [vmem:[#allocation5 + $0x38] sm:$0xff]
    %v113 = vld [vmem:[#allocation5 + $0x40] sm:$0xff]
    %v114 = vld [vmem:[#allocation5 + $0x48] sm:$0xff]
    %v115 = vld [vmem:[#allocation5 + $0x50] sm:$0xff]
    %v116 = vld [vmem:[#allocation5 + $0x58] sm:$0xff]
    %v117 = vld [vmem:[#allocation5 + $0x60] sm:$0xff]
    %v118 = vld [vmem:[#allocation5 + $0x68] sm:$0xff]
    %v119 = vld [vmem:[#allocation5 + $0x70] sm:$0xff]
    %v120 = vld [vmem:[#allocation5 + $0x78] sm:$0xff]
    %v121 = vld [vmem:[%s4] sm:$0x1]
    %v122 = vsel %vm102, 1, 0
    %vm123 = vcmp.eq.s32.totalorder %v122, 1
    %v124 = vsel %vm123, %v99, 0.0
    %v125 = vrot.slane %v124, 4
    %v126 = vadd.f32 %v124, %v125
    %v127 = vrot.slane %v126, 2
    %v128 = vadd.f32 %v126, %v127
    %v129 = vrot.slane %v128, 1
    %v130 = vadd.f32 %v128, %v129
    %v131 = vmul.f32 %v130, 0.125
    %v132 = vsub.f32 %v99, %v131
    %v133 = vsel %vm123, %v132, 0.0
    %v134 = vmul.f32 %v133, %v133
    %v135 = vrot.slane %v134, 4
    %v136 = vadd.f32 %v134, %v135
    %v137 = vrot.slane %v136, 2
    %v138 = vadd.f32 %v136, %v137
    %v139 = vrot.slane %v138, 1
    %v140 = vadd.f32 %v138, %v139
    %v141 = vmul.f32 %v140, 0.125
    %v142 = vadd.f32 %v141, 1e-05
    %v143 = vrsqrt.pop %v142
    %v144 = vmul.f32 %v132, %v143
    %v146 = vlaneseq
    %v147 = vshrl.u32 %v146, 7
    %v148 = vsub.s32 0, %v147
    %v149 = vrot.slane %v103, %v148
    %v151 = vmul.f32 %v144, %v149
    %v153 = vlaneseq
    %v154 = vshrl.u32 %v153, 7
    %v155 = vsub.s32 0, %v154
    %v156 = vrot.slane %v104, %v155
    %v158 = vadd.f32 %v151, %v156
    %v159 = vsel %vm123, %v158, 0.0
    %v160 = vpack.c.bf16 %v159, %v159
    %v161 = vpack.c.bf16 %v106, %v105
    %v162 = vpack.c.bf16 %v108, %v107
    %v163 = vpack.c.bf16 %v110, %v109
    %v164 = vpack.c.bf16 %v112, %v111
    %v165 = vpack.c.bf16 %v114, %v113
    %v166 = vpack.c.bf16 %v116, %v115
    %v167 = vpack.c.bf16 %v118, %v117
    %v168 = vpack.c.bf16 %v120, %v119
    %v170 = vlaneseq
    %v171 = vshrl.u32 %v170, 7
    %v172 = vsub.s32 0, %v171
    %v173 = vrot.slane %v121, %v172
    %175 = vmatprep.subr.bf16.mxu0 0
    %176 = vmatpush1.bf16.msra.mxu0 %v161
    %177 = vmatprep.subr.bf16.mxu0 0
    %178 = vmatpush1.bf16.msra.mxu0 %v162
    %179 = vmatprep.subr.bf16.mxu0 0
    %180 = vmatpush1.bf16.msra.mxu0 %v163
    %181 = vmatprep.subr.bf16.mxu0 0
    %182 = vmatpush1.bf16.msra.mxu0 %v164
    %183 = vmatprep.subr.bf16.mxu0 0
    %184 = vmatpush1.bf16.msra.mxu0 %v165
    %185 = vmatprep.subr.bf16.mxu0 0
    %186 = vmatpush1.bf16.msra.mxu0 %v166
    %187 = vmatprep.subr.bf16.mxu0 0
    %188 = vmatpush1.bf16.msra.mxu0 %v167
    %189 = vmatprep.subr.bf16.mxu0 0
    %190 = vmatpush1.bf16.msra.mxu0 %v168
    %191 = vmatprep.subr.bf16.mxu0 0
    %192 = vmatpush1.bf16.msra.mxu0 0
    %193 = vmatprep.subr.bf16.mxu0 0
    %194 = vmatpush1.bf16.msra.mxu0 0
    %195 = vmatprep.subr.bf16.mxu0 0
    %196 = vmatpush1.bf16.msra.mxu0 0
    %197 = vmatprep.subr.bf16.mxu0 0
    %198 = vmatpush1.bf16.msra.mxu0 0
    %199 = vmatprep.subr.bf16.mxu0 0
    %200 = vmatpush1.bf16.msra.mxu0 0
    %201 = vmatprep.subr.bf16.mxu0 0
    %202 = vmatpush1.bf16.msra.mxu0 0
    %203 = vmatprep.subr.bf16.mxu0 0
    %204 = vmatpush1.bf16.msra.mxu0 0
    %205 = vmatprep.subr.bf16.mxu0 0
    %206 = vmatpush1.bf16.msra.mxu0 0
    %207 = vmatprep.mubr.bf16.mxu0 0
    %208 = vmatmul.mubr.bf16.gmra.mrb[0].mxu0 %v160
    %v209 = vpop.f32.mrb[0].mxu0
    %v210 = vadd.f32 %v173, %v209
    %v211 = vpop.f32.mrb[0].mxu0
    %v212 = vpop.f32.mrb[0].mxu0
    %v213 = vpop.f32.mrb[0].mxu0
    %214 = vdwg.mxu0
    %v215 = vmax.f32 %v210, 0.0
    %v216 = vld [vmem:[%s5] sm:$0x1]
    %v217 = vld [vmem:[%s6] sm:$0x1]
    %v218 = vld [vmem:[#allocation7] sm:$0xff]
    %v219 = vld [vmem:[#allocation7 + $0x8] sm:$0xff]
    %v220 = vld [vmem:[#allocation7 + $0x10] sm:$0xff]
    %v221 = vld [vmem:[#allocation7 + $0x18] sm:$0xff]
    %v222 = vld [vmem:[#allocation7 + $0x20] sm:$0xff]
    %v223 = vld [vmem:[#allocation7 + $0x28] sm:$0xff]
    %v224 = vld [vmem:[#allocation7 + $0x30] sm:$0xff]
    %v225 = vld [vmem:[#allocation7 + $0x38] sm:$0xff]
    %v226 = vld [vmem:[#allocation7 + $0x40] sm:$0xff]
    %v227 = vld [vmem:[#allocation7 + $0x48] sm:$0xff]
    %v228 = vld [vmem:[#allocation7 + $0x50] sm:$0xff]
    %v229 = vld [vmem:[#allocation7 + $0x58] sm:$0xff]
    %v230 = vld [vmem:[#allocation7 + $0x60] sm:$0xff]
    %v231 = vld [vmem:[#allocation7 + $0x68] sm:$0xff]
    %v232 = vld [vmem:[#allocation7 + $0x70] sm:$0xff]
    %v233 = vld [vmem:[#allocation7 + $0x78] sm:$0xff]
    %v234 = vld [vmem:[%s8] sm:$0x1]
    %v235 = vsel %vm123, %v215, 0.0
    %v236 = vrot.slane %v235, 4
    %v237 = vadd.f32 %v235, %v236
    %v238 = vrot.slane %v237, 2
    %v239 = vadd.f32 %v237, %v238
    %v240 = vrot.slane %v239, 1
    %v241 = vadd.f32 %v239, %v240
    %v242 = vmul.f32 %v241, 0.125
    %v243 = vsub.f32 %v215, %v242
    %v244 = vsel %vm123, %v243, 0.0
    %v245 = vmul.f32 %v244, %v244
    %v246 = vrot.slane %v245, 4
    %v247 = vadd.f32 %v245, %v246
    %v248 = vrot.slane %v247, 2
    %v249 = vadd.f32 %v247, %v248
    %v250 = vrot.slane %v249, 1
    %v251 = vadd.f32 %v249, %v250
    %v252 = vmul.f32 %v251, 0.125
    %v253 = vadd.f32 %v252, 1e-05
    %v254 = vrsqrt.pop %v253
    %v255 = vmul.f32 %v243, %v254
    %v257 = vlaneseq
    %v258 = vshrl.u32 %v257, 7
    %v259 = vsub.s32 0, %v258
    %v260 = vrot.slane %v216, %v259
    %v262 = vmul.f32 %v255, %v260
    %v264 = vlaneseq
    %v265 = vshrl.u32 %v264, 7
    %v266 = vsub.s32 0, %v265
    %v267 = vrot.slane %v217, %v266
    %v269 = vadd.f32 %v262, %v267
    %v270 = vsel %vm123, %v269, 0.0
    %v271 = vpack.c.bf16 %v270, %v270
    %v272 = vpack.c.bf16 %v219, %v218
    %v273 = vpack.c.bf16 %v221, %v220
    %v274 = vpack.c.bf16 %v223, %v222
    %v275 = vpack.c.bf16 %v225, %v224
    %v276 = vpack.c.bf16 %v227, %v226
    %v277 = vpack.c.bf16 %v229, %v228
    %v278 = vpack.c.bf16 %v231, %v230
    %v279 = vpack.c.bf16 %v233, %v232
    %v281 = vlaneseq
    %v282 = vshrl.u32 %v281, 7
    %v283 = vsub.s32 0, %v282
    %v284 = vrot.slane %v234, %v283
    %286 = vmatprep.subr.bf16.mxu0 0
    %287 = vmatpush1.bf16.msra.mxu0 %v272
    %288 = vmatprep.subr.bf16.mxu0 0
    %289 = vmatpush1.bf16.msra.mxu0 %v273
    %290 = vmatprep.subr.bf16.mxu0 0
    %291 = vmatpush1.bf16.msra.mxu0 %v274
    %292 = vmatprep.subr.bf16.mxu0 0
    %293 = vmatpush1.bf16.msra.mxu0 %v275
    %294 = vmatprep.subr.bf16.mxu0 0
    %295 = vmatpush1.bf16.msra.mxu0 %v276
    %296 = vmatprep.subr.bf16.mxu0 0
    %297 = vmatpush1.bf16.msra.mxu0 %v277
    %298 = vmatprep.subr.bf16.mxu0 0
    %299 = vmatpush1.bf16.msra.mxu0 %v278
    %300 = vmatprep.subr.bf16.mxu0 0
    %301 = vmatpush1.bf16.msra.mxu0 %v279
    %302 = vmatprep.subr.bf16.mxu0 0
    %303 = vmatpush1.bf16.msra.mxu0 0
    %304 = vmatprep.subr.bf16.mxu0 0
    %305 = vmatpush1.bf16.msra.mxu0 0
    %306 = vmatprep.subr.bf16.mxu0 0
    %307 = vmatpush1.bf16.msra.mxu0 0
    %308 = vmatprep.subr.bf16.mxu0 0
    %309 = vmatpush1.bf16.msra.mxu0 0
    %310 = vmatprep.subr.bf16.mxu0 0
    %311 = vmatpush1.bf16.msra.mxu0 0
    %312 = vmatprep.subr.bf16.mxu0 0
    %313 = vmatpush1.bf16.msra.mxu0 0
    %314 = vmatprep.subr.bf16.mxu0 0
    %315 = vmatpush1.bf16.msra.mxu0 0
    %316 = vmatprep.subr.bf16.mxu0 0
    %317 = vmatpush1.bf16.msra.mxu0 0
    %318 = vmatprep.mubr.bf16.mxu0 0
    %319 = vmatmul.mubr.bf16.gmra.mrb[0].mxu0 %v271
    %v320 = vpop.f32.mrb[0].mxu0
    %v321 = vadd.f32 %v284, %v320
    %v322 = vpop.f32.mrb[0].mxu0
    %v323 = vpop.f32.mrb[0].mxu0
    %v324 = vpop.f32.mrb[0].mxu0
    %325 = vdwg.mxu0
    %v326 = vmax.f32 %v321, 0.0
    %v327 = vld [vmem:[%s9] sm:$0x1]
    %v328 = vld [vmem:[%s10] sm:$0x1]
    %v329 = vld [vmem:[#allocation8] sm:$0xff]
    %v330 = vld [vmem:[#allocation8 + $0x8] sm:$0xff]
    %v331 = vld [vmem:[#allocation8 + $0x10] sm:$0xff]
    %v332 = vld [vmem:[#allocation8 + $0x18] sm:$0xff]
    %v333 = vld [vmem:[#allocation8 + $0x20] sm:$0xff]
    %v334 = vld [vmem:[#allocation8 + $0x28] sm:$0xff]
    %v335 = vld [vmem:[#allocation8 + $0x30] sm:$0xff]
    %v336 = vld [vmem:[#allocation8 + $0x38] sm:$0xff]
    %v337 = vld [vmem:[#allocation8 + $0x40] sm:$0xff]
    %v338 = vld [vmem:[#allocation8 + $0x48] sm:$0xff]
    %v339 = vld [vmem:[#allocation8 + $0x50] sm:$0xff]
    %v340 = vld [vmem:[#allocation8 + $0x58] sm:$0xff]
    %v341 = vld [vmem:[#allocation8 + $0x60] sm:$0xff]
    %v342 = vld [vmem:[#allocation8 + $0x68] sm:$0xff]
    %v343 = vld [vmem:[#allocation8 + $0x70] sm:$0xff]
    %v344 = vld [vmem:[#allocation8 + $0x78] sm:$0xff]
    %v345 = vld [vmem:[%s12] sm:$0x1]
    %v346 = vsel %vm123, %v326, 0.0
    %v347 = vrot.slane %v346, 4
    %v348 = vadd.f32 %v346, %v347
    %v349 = vrot.slane %v348, 2
    %v350 = vadd.f32 %v348, %v349
    %v351 = vrot.slane %v350, 1
    %v352 = vadd.f32 %v350, %v351
    %v353 = vmul.f32 %v352, 0.125
    %v354 = vsub.f32 %v326, %v353
    %v355 = vsel %vm123, %v354, 0.0
    %v356 = vmul.f32 %v355, %v355
    %v357 = vrot.slane %v356, 4
    %v358 = vadd.f32 %v356, %v357
    %v359 = vrot.slane %v358, 2
    %v360 = vadd.f32 %v358, %v359
    %v361 = vrot.slane %v360, 1
    %v362 = vadd.f32 %v360, %v361
    %v363 = vmul.f32 %v362, 0.125
    %v364 = vadd.f32 %v363, 1e-05
    %v365 = vrsqrt.pop %v364
    %v366 = vmul.f32 %v354, %v365
    %v368 = vlaneseq
    %v369 = vshrl.u32 %v368, 7
    %v370 = vsub.s32 0, %v369
    %v371 = vrot.slane %v327, %v370
    %v373 = vmul.f32 %v366, %v371
    %v375 = vlaneseq
    %v376 = vshrl.u32 %v375, 7
    %v377 = vsub.s32 0, %v376
    %v378 = vrot.slane %v328, %v377
    %v380 = vadd.f32 %v373, %v378
    %v381 = vsel %vm123, %v380, 0.0
    %v382 = vpack.c.bf16 %v381, %v381
    %v383 = vpack.c.bf16 %v330, %v329
    %v384 = vpack.c.bf16 %v332, %v331
    %v385 = vpack.c.bf16 %v334, %v333
    %v386 = vpack.c.bf16 %v336, %v335
    %v387 = vpack.c.bf16 %v338, %v337
    %v388 = vpack.c.bf16 %v340, %v339
    %v389 = vpack.c.bf16 %v342, %v341
    %v390 = vpack.c.bf16 %v344, %v343
    %v392 = vlaneseq
    %v393 = vshrl.u32 %v392, 7
    %v394 = vsub.s32 0, %v393
    %v395 = vrot.slane %v345, %v394
    %397 = vmatprep.subr.bf16.mxu0 0
    %398 = vmatpush1.bf16.msra.mxu0 %v383
    %399 = vmatprep.subr.bf16.mxu0 0
    %400 = vmatpush1.bf16.msra.mxu0 %v384
    %401 = vmatprep.subr.bf16.mxu0 0
    %402 = vmatpush1.bf16.msra.mxu0 %v385
    %403 = vmatprep.subr.bf16.mxu0 0
    %404 = vmatpush1.bf16.msra.mxu0 %v386
    %405 = vmatprep.subr.bf16.mxu0 0
    %406 = vmatpush1.bf16.msra.mxu0 %v387
    %407 = vmatprep.subr.bf16.mxu0 0
    %408 = vmatpush1.bf16.msra.mxu0 %v388
    %409 = vmatprep.subr.bf16.mxu0 0
    %410 = vmatpush1.bf16.msra.mxu0 %v389
    %411 = vmatprep.subr.bf16.mxu0 0
    %412 = vmatpush1.bf16.msra.mxu0 %v390
    %413 = vmatprep.subr.bf16.mxu0 0
    %414 = vmatpush1.bf16.msra.mxu0 0
    %415 = vmatprep.subr.bf16.mxu0 0
    %416 = vmatpush1.bf16.msra.mxu0 0
    %417 = vmatprep.subr.bf16.mxu0 0
    %418 = vmatpush1.bf16.msra.mxu0 0
    %419 = vmatprep.subr.bf16.mxu0 0
    %420 = vmatpush1.bf16.msra.mxu0 0
    %421 = vmatprep.subr.bf16.mxu0 0
    %422 = vmatpush1.bf16.msra.mxu0 0
    %423 = vmatprep.subr.bf16.mxu0 0
    %424 = vmatpush1.bf16.msra.mxu0 0
    %425 = vmatprep.subr.bf16.mxu0 0
    %426 = vmatpush1.bf16.msra.mxu0 0
    %427 = vmatprep.subr.bf16.mxu0 0
    %428 = vmatpush1.bf16.msra.mxu0 0
    %429 = vmatprep.mubr.bf16.mxu0 0
    %430 = vmatmul.mubr.bf16.gmra.mrb[0].mxu0 %v382
    %v431 = vpop.f32.mrb[0].mxu0
    %v432 = vadd.f32 %v395, %v431
    %v433 = vpop.f32.mrb[0].mxu0
    %v434 = vpop.f32.mrb[0].mxu0
    %v435 = vpop.f32.mrb[0].mxu0
    %436 = vdwg.mxu0
    %437 = vst [vmem:[#allocation10] sm:$0xff] %v432
    // Predicated region
    $region70: #{tpu_custom_call.1} parent=1 // pred_check
      _
    $region71: #{tpu_custom_call.1} parent=1 // pred_check_branch
      %439 = sbr.rel (0) target = $region73
    $region72: #{tpu_custom_call.1} parent=1 // pred_region
      %s441 = ssub.s32 128, 128
      %442 = vsyncadd [#allocation4], %s441
      %s444 = sshll.u32 [#allocation10], 4
      %s445 = int_to_ptr.vmem [resolvable:$true] %s444
      %447 = dma.vmem_to_hbm [thread:$0]  %s445, 128, %s13, [#allocation4]
    $region73: #{tpu_custom_call.1} parent=1 // pred_fallthru
      _
    // Predicated region
    $region74: #{tpu_custom_call.1} parent=1 // pred_check
      _
    $region75: #{tpu_custom_call.1} parent=1 // pred_check_branch
      %449 = sbr.rel (0) target = $region77
    $region76: #{tpu_custom_call.1} parent=1 // pred_region
      %450 = dma.done [#allocation4], 128
    $region77: #{tpu_custom_call.1} parent=1 // pred_fallthru
      _
    %451 = vsyncpa [#allocation3], 1
    %452 = vsyncpa [#allocation6], 1
    %453 = vsyncpa [#allocation9], 1
    %454 = vsyncpa [#allocation4], 1

</llo_original>
